<compile_context>
chip_gen: v7x
topology: tpu7x:2x2x1
jax: 0.10.0
libtpu: 0.0.40
codegen_flags: <defaults>
</compile_context>

<pallas_src>
import numpy as np
import jax
import jax.numpy as jnp
from jax.experimental import pallas as pl
from jax.experimental.pallas import tpu as pltpu

KH, KW, CIN, COUT = 5, 5, 3, 30
_MAX_TILE_H = 32  # row-tile cap (keeps double-buffered output block small)


def _srm_filters_cin() -> np.ndarray:
    """The three per-input-channel 5x5 SRM filters, identical to PyTorch __init__."""
    f1 = (1.0 / 4.0) * np.array(
        [[0, 0, 0, 0, 0],
         [0, -1, 2, -1, 0],
         [0, 2, -4, 2, 0],
         [0, -1, 2, -1, 0],
         [0, 0, 0, 0, 0]], dtype=np.float64)
    f2 = (1.0 / 12.0) * np.array(
        [[-1, 2, -2, 2, -1],
         [2, -6, 8, -6, 2],
         [-2, 8, -12, 8, -2],
         [2, -6, 8, -6, 2],
         [-1, 2, -2, 2, -1]], dtype=np.float64)
    f3 = (1.0 / 2.0) * np.array(
        [[0, 0, 0, 0, 0],
         [0, 0, 0, 0, 0],
         [0, 1, -2, 1, 0],
         [0, 0, 0, 0, 0],
         [0, 0, 0, 0, 0]], dtype=np.float64)
    return np.stack([f1, f2, f3]).astype(np.float32)   # (CIN, KH, KW)


_FILTERS = _srm_filters_cin()


def _srm_weights_oihw() -> np.ndarray:
    """Full (30, 3, 5, 5) OIHW weight (all 30 output channels identical) — reference only."""
    k = np.zeros((COUT, CIN, KH, KW), dtype=np.float32)
    for c in range(CIN):
        k[:, c, :, :] = _FILTERS[c]
    return k


def _srm_kernel(x_ref, o_ref):
    # x_ref: (1, CIN, H_pad, W)          -- full (padded) image for batch b
    # o_ref: (1, COUT, TILE_H, Wo)       -- one row-tile, all 30 (identical) channels
    i = pl.program_id(1)                  # row-tile index
    th = o_ref.shape[2]
    wo = o_ref.shape[3]
    row0 = i * th                          # first output row of this tile

    acc = jnp.zeros((th, wo), jnp.float32)
    # Unrolled constant-weight VPU FMAs; skip all-zero filter rows / zero taps.
    for c in range(CIN):
        for ki in range(KH):
            row_w = _FILTERS[c, ki]
            if not np.any(row_w):
                continue
            # One (TILE_H, W) band load per (channel, filter-row), reused
            # across the kj lane shifts.
            band = x_ref[0, c, pl.ds(row0 + ki, th), :].astype(jnp.float32)
            for kj in range(KW):
                wv = float(row_w[kj])
                if wv == 0.0:
                    continue
                acc = acc + wv * band[:, kj:kj + wo]

    # All 30 output channels are identical: compute once, broadcast at store.
    out = jnp.broadcast_to(acc.astype(o_ref.dtype)[None, None],
                           (1, o_ref.shape[1], th, wo))
    o_ref[...] = out


def srm_forward(x_nchw: jax.Array) -> jax.Array:
    """Exact equivalent of SRM.forward: NCHW in -> NCHW out (valid 5x5 conv, 30 out ch)."""
    n, c, h, w = x_nchw.shape
    assert c == CIN, f"SRM expects {CIN} input channels, got {c}"
    ho, wo = h - KH + 1, w - KW + 1

    # Row-tile the output; whole image per step when small.
    tile_h = ho if ho <= _MAX_TILE_H else _MAX_TILE_H
    grid_rows = pl.cdiv(ho, tile_h)

    # Pad input rows so every in-kernel read stays in bounds for the (possibly
    # ragged) last row-tile; the ragged part of the output block is masked by
    # Pallas at writeback.
    h_needed = grid_rows * tile_h + KH - 1
    x_in = x_nchw
    if h_needed > h:
        x_in = jnp.pad(x_nchw, ((0, 0), (0, 0), (0, h_needed - h), (0, 0)))
    h_pad = x_in.shape[2]

    out = pl.pallas_call(
        _srm_kernel,
        out_shape=jax.ShapeDtypeStruct((n, COUT, ho, wo), x_nchw.dtype),
        grid_spec=pltpu.PrefetchScalarGridSpec(
            num_scalar_prefetch=0,
            grid=(n, grid_rows),
            in_specs=[
                # Full image per batch element; re-DMA'd only when b changes.
                pl.BlockSpec((1, CIN, h_pad, w), lambda b, i: (b, 0, 0, 0)),
            ],
            # Lane-dense output block: Wo on lanes, whole 30-channel tile per store.
            out_specs=pl.BlockSpec((1, COUT, tile_h, wo), lambda b, i: (b, 0, i, 0)),
        ),
        compiler_params=pltpu.CompilerParams(
            dimension_semantics=("parallel", "parallel")),
    )(x_in)
    return out


if __name__ == "__main__":
    key = jax.random.PRNGKey(0)
    x = jax.random.normal(key, (2, 3, 16, 16), dtype=jnp.float32)  # NCHW

    out = jax.block_until_ready(srm_forward(x))
    assert out.shape == (2, 30, 12, 12), out.shape

    # Reference: plain XLA conv with identical semantics to the PyTorch module.
    ref = jax.lax.conv_general_dilated(
        x, jnp.asarray(_srm_weights_oihw()),
        window_strides=(1, 1), padding="VALID",
        dimension_numbers=("NCHW", "OIHW", "NCHW"))
    assert np.allclose(np.asarray(out), np.asarray(ref), atol=1e-3, rtol=1e-3)

    print("KERNEL_OK")
</pallas_src>

<mosaic_0001>
module attributes {stable_mosaic.version = 11 : i64} {
  func.func @_srm_kernel(%arg0: i32, %arg1: i32, %arg2: memref<1x3x16x16xf32, #tpu.memory_space<vmem>>, %arg3: memref<1x30x12x12xf32, #tpu.memory_space<vmem>>) attributes {dimension_semantics = [#tpu.dimension_semantics<parallel>, #tpu.dimension_semantics<parallel>], iteration_bounds = array<i64: 2, 1>, scalar_prefetch = 0 : i64, scratch_operands = 0 : i64, tpu.core_type = #tpu.core_type<tc>, window_params = [{transform_indices = @transform_0, window_bounds = array<i64: 1, 3, 16, 16>}, {transform_indices = @transform_1, window_bounds = array<i64: 1, 30, 12, 12>}]} {
    %c12_i32 = arith.constant 12 : i32
    %0 = arith.muli %arg1, %c12_i32 : i32
    %cst = arith.constant 0.000000e+00 : f32
    %1 = vector.broadcast %cst : f32 to vector<12x12xf32>
    %c1_i32 = arith.constant 1 : i32
    %2 = arith.addi %0, %c1_i32 : i32
    %c0 = arith.constant 0 : index
    %c0_0 = arith.constant 0 : index
    %3 = arith.index_cast %2 : i32 to index
    %c0_1 = arith.constant 0 : index
    %4 = vector.load %arg2[%c0, %c0_0, %3, %c0_1] : memref<1x3x16x16xf32, #tpu.memory_space<vmem>>, vector<1x1x12x16xf32>
    %5 = vector.shape_cast %4 : vector<1x1x12x16xf32> to vector<12x16xf32>
    %6 = vector.extract_strided_slice %5 {offsets = [0, 1], sizes = [12, 12], strides = [1, 1]} : vector<12x16xf32> to vector<12x12xf32>
    %cst_2 = arith.constant -2.500000e-01 : f32
    %7 = vector.broadcast %cst_2 : f32 to vector<12x12xf32>
    %8 = arith.mulf %7, %6 : vector<12x12xf32>
    %9 = arith.addf %1, %8 : vector<12x12xf32>
    %10 = vector.extract_strided_slice %5 {offsets = [0, 2], sizes = [12, 12], strides = [1, 1]} : vector<12x16xf32> to vector<12x12xf32>
    %cst_3 = arith.constant 5.000000e-01 : f32
    %11 = vector.broadcast %cst_3 : f32 to vector<12x12xf32>
    %12 = arith.mulf %11, %10 : vector<12x12xf32>
    %13 = arith.addf %9, %12 : vector<12x12xf32>
    %14 = vector.extract_strided_slice %5 {offsets = [0, 3], sizes = [12, 12], strides = [1, 1]} : vector<12x16xf32> to vector<12x12xf32>
    %cst_4 = arith.constant -2.500000e-01 : f32
    %15 = vector.broadcast %cst_4 : f32 to vector<12x12xf32>
    %16 = arith.mulf %15, %14 : vector<12x12xf32>
    %17 = arith.addf %13, %16 : vector<12x12xf32>
    %c2_i32 = arith.constant 2 : i32
    %18 = arith.addi %0, %c2_i32 : i32
    %c0_5 = arith.constant 0 : index
    %c0_6 = arith.constant 0 : index
    %19 = arith.index_cast %18 : i32 to index
    %c0_7 = arith.constant 0 : index
    %20 = vector.load %arg2[%c0_5, %c0_6, %19, %c0_7] : memref<1x3x16x16xf32, #tpu.memory_space<vmem>>, vector<1x1x12x16xf32>
    %21 = vector.shape_cast %20 : vector<1x1x12x16xf32> to vector<12x16xf32>
    %22 = vector.extract_strided_slice %21 {offsets = [0, 1], sizes = [12, 12], strides = [1, 1]} : vector<12x16xf32> to vector<12x12xf32>
    %cst_8 = arith.constant 5.000000e-01 : f32
    %23 = vector.broadcast %cst_8 : f32 to vector<12x12xf32>
    %24 = arith.mulf %23, %22 : vector<12x12xf32>
    %25 = arith.addf %17, %24 : vector<12x12xf32>
    %26 = vector.extract_strided_slice %21 {offsets = [0, 2], sizes = [12, 12], strides = [1, 1]} : vector<12x16xf32> to vector<12x12xf32>
    %cst_9 = arith.constant -1.000000e+00 : f32
    %27 = vector.broadcast %cst_9 : f32 to vector<12x12xf32>
    %28 = arith.mulf %27, %26 : vector<12x12xf32>
    %29 = arith.addf %25, %28 : vector<12x12xf32>
    %30 = vector.extract_strided_slice %21 {offsets = [0, 3], sizes = [12, 12], strides = [1, 1]} : vector<12x16xf32> to vector<12x12xf32>
    %cst_10 = arith.constant 5.000000e-01 : f32
    %31 = vector.broadcast %cst_10 : f32 to vector<12x12xf32>
    %32 = arith.mulf %31, %30 : vector<12x12xf32>
    %33 = arith.addf %29, %32 : vector<12x12xf32>
    %c3_i32 = arith.constant 3 : i32
    %34 = arith.addi %0, %c3_i32 : i32
    %c0_11 = arith.constant 0 : index
    %c0_12 = arith.constant 0 : index
    %35 = arith.index_cast %34 : i32 to index
    %c0_13 = arith.constant 0 : index
    %36 = vector.load %arg2[%c0_11, %c0_12, %35, %c0_13] : memref<1x3x16x16xf32, #tpu.memory_space<vmem>>, vector<1x1x12x16xf32>
    %37 = vector.shape_cast %36 : vector<1x1x12x16xf32> to vector<12x16xf32>
    %38 = vector.extract_strided_slice %37 {offsets = [0, 1], sizes = [12, 12], strides = [1, 1]} : vector<12x16xf32> to vector<12x12xf32>
    %cst_14 = arith.constant -2.500000e-01 : f32
    %39 = vector.broadcast %cst_14 : f32 to vector<12x12xf32>
    %40 = arith.mulf %39, %38 : vector<12x12xf32>
    %41 = arith.addf %33, %40 : vector<12x12xf32>
    %42 = vector.extract_strided_slice %37 {offsets = [0, 2], sizes = [12, 12], strides = [1, 1]} : vector<12x16xf32> to vector<12x12xf32>
    %cst_15 = arith.constant 5.000000e-01 : f32
    %43 = vector.broadcast %cst_15 : f32 to vector<12x12xf32>
    %44 = arith.mulf %43, %42 : vector<12x12xf32>
    %45 = arith.addf %41, %44 : vector<12x12xf32>
    %46 = vector.extract_strided_slice %37 {offsets = [0, 3], sizes = [12, 12], strides = [1, 1]} : vector<12x16xf32> to vector<12x12xf32>
    %cst_16 = arith.constant -2.500000e-01 : f32
    %47 = vector.broadcast %cst_16 : f32 to vector<12x12xf32>
    %48 = arith.mulf %47, %46 : vector<12x12xf32>
    %49 = arith.addf %45, %48 : vector<12x12xf32>
    %c0_i32 = arith.constant 0 : i32
    %50 = arith.addi %0, %c0_i32 : i32
    %c0_17 = arith.constant 0 : index
    %c1 = arith.constant 1 : index
    %51 = arith.index_cast %50 : i32 to index
    %c0_18 = arith.constant 0 : index
    %52 = vector.load %arg2[%c0_17, %c1, %51, %c0_18] : memref<1x3x16x16xf32, #tpu.memory_space<vmem>>, vector<1x1x12x16xf32>
    %53 = vector.shape_cast %52 : vector<1x1x12x16xf32> to vector<12x16xf32>
    %54 = vector.extract_strided_slice %53 {offsets = [0, 0], sizes = [12, 12], strides = [1, 1]} : vector<12x16xf32> to vector<12x12xf32>
    %cst_19 = arith.constant -0.0833333358 : f32
    %55 = vector.broadcast %cst_19 : f32 to vector<12x12xf32>
    %56 = arith.mulf %55, %54 : vector<12x12xf32>
    %57 = arith.addf %49, %56 : vector<12x12xf32>
    %58 = vector.extract_strided_slice %53 {offsets = [0, 1], sizes = [12, 12], strides = [1, 1]} : vector<12x16xf32> to vector<12x12xf32>
    %cst_20 = arith.constant 0.166666672 : f32
    %59 = vector.broadcast %cst_20 : f32 to vector<12x12xf32>
    %60 = arith.mulf %59, %58 : vector<12x12xf32>
    %61 = arith.addf %57, %60 : vector<12x12xf32>
    %62 = vector.extract_strided_slice %53 {offsets = [0, 2], sizes = [12, 12], strides = [1, 1]} : vector<12x16xf32> to vector<12x12xf32>
    %cst_21 = arith.constant -0.166666672 : f32
    %63 = vector.broadcast %cst_21 : f32 to vector<12x12xf32>
    %64 = arith.mulf %63, %62 : vector<12x12xf32>
    %65 = arith.addf %61, %64 : vector<12x12xf32>
    %66 = vector.extract_strided_slice %53 {offsets = [0, 3], sizes = [12, 12], strides = [1, 1]} : vector<12x16xf32> to vector<12x12xf32>
    %cst_22 = arith.constant 0.166666672 : f32
    %67 = vector.broadcast %cst_22 : f32 to vector<12x12xf32>
    %68 = arith.mulf %67, %66 : vector<12x12xf32>
    %69 = arith.addf %65, %68 : vector<12x12xf32>
    %70 = vector.extract_strided_slice %53 {offsets = [0, 4], sizes = [12, 12], strides = [1, 1]} : vector<12x16xf32> to vector<12x12xf32>
    %cst_23 = arith.constant -0.0833333358 : f32
    %71 = vector.broadcast %cst_23 : f32 to vector<12x12xf32>
    %72 = arith.mulf %71, %70 : vector<12x12xf32>
    %73 = arith.addf %69, %72 : vector<12x12xf32>
    %c1_i32_24 = arith.constant 1 : i32
    %74 = arith.addi %0, %c1_i32_24 : i32
    %c0_25 = arith.constant 0 : index
    %c1_26 = arith.constant 1 : index
    %75 = arith.index_cast %74 : i32 to index
    %c0_27 = arith.constant 0 : index
    %76 = vector.load %arg2[%c0_25, %c1_26, %75, %c0_27] : memref<1x3x16x16xf32, #tpu.memory_space<vmem>>, vector<1x1x12x16xf32>
    %77 = vector.shape_cast %76 : vector<1x1x12x16xf32> to vector<12x16xf32>
    %78 = vector.extract_strided_slice %77 {offsets = [0, 0], sizes = [12, 12], strides = [1, 1]} : vector<12x16xf32> to vector<12x12xf32>
    %cst_28 = arith.constant 0.166666672 : f32
    %79 = vector.broadcast %cst_28 : f32 to vector<12x12xf32>
    %80 = arith.mulf %79, %78 : vector<12x12xf32>
    %81 = arith.addf %73, %80 : vector<12x12xf32>
    %82 = vector.extract_strided_slice %77 {offsets = [0, 1], sizes = [12, 12], strides = [1, 1]} : vector<12x16xf32> to vector<12x12xf32>
    %cst_29 = arith.constant -5.000000e-01 : f32
    %83 = vector.broadcast %cst_29 : f32 to vector<12x12xf32>
    %84 = arith.mulf %83, %82 : vector<12x12xf32>
    %85 = arith.addf %81, %84 : vector<12x12xf32>
    %86 = vector.extract_strided_slice %77 {offsets = [0, 2], sizes = [12, 12], strides = [1, 1]} : vector<12x16xf32> to vector<12x12xf32>
    %cst_30 = arith.constant 0.666666686 : f32
    %87 = vector.broadcast %cst_30 : f32 to vector<12x12xf32>
    %88 = arith.mulf %87, %86 : vector<12x12xf32>
    %89 = arith.addf %85, %88 : vector<12x12xf32>
    %90 = vector.extract_strided_slice %77 {offsets = [0, 3], sizes = [12, 12], strides = [1, 1]} : vector<12x16xf32> to vector<12x12xf32>
    %cst_31 = arith.constant -5.000000e-01 : f32
    %91 = vector.broadcast %cst_31 : f32 to vector<12x12xf32>
    %92 = arith.mulf %91, %90 : vector<12x12xf32>
    %93 = arith.addf %89, %92 : vector<12x12xf32>
    %94 = vector.extract_strided_slice %77 {offsets = [0, 4], sizes = [12, 12], strides = [1, 1]} : vector<12x16xf32> to vector<12x12xf32>
    %cst_32 = arith.constant 0.166666672 : f32
    %95 = vector.broadcast %cst_32 : f32 to vector<12x12xf32>
    %96 = arith.mulf %95, %94 : vector<12x12xf32>
    %97 = arith.addf %93, %96 : vector<12x12xf32>
    %c2_i32_33 = arith.constant 2 : i32
    %98 = arith.addi %0, %c2_i32_33 : i32
    %c0_34 = arith.constant 0 : index
    %c1_35 = arith.constant 1 : index
    %99 = arith.index_cast %98 : i32 to index
    %c0_36 = arith.constant 0 : index
    %100 = vector.load %arg2[%c0_34, %c1_35, %99, %c0_36] : memref<1x3x16x16xf32, #tpu.memory_space<vmem>>, vector<1x1x12x16xf32>
    %101 = vector.shape_cast %100 : vector<1x1x12x16xf32> to vector<12x16xf32>
    %102 = vector.extract_strided_slice %101 {offsets = [0, 0], sizes = [12, 12], strides = [1, 1]} : vector<12x16xf32> to vector<12x12xf32>
    %cst_37 = arith.constant -0.166666672 : f32
    %103 = vector.broadcast %cst_37 : f32 to vector<12x12xf32>
    %104 = arith.mulf %103, %102 : vector<12x12xf32>
    %105 = arith.addf %97, %104 : vector<12x12xf32>
    %106 = vector.extract_strided_slice %101 {offsets = [0, 1], sizes = [12, 12], strides = [1, 1]} : vector<12x16xf32> to vector<12x12xf32>
    %cst_38 = arith.constant 0.666666686 : f32
    %107 = vector.broadcast %cst_38 : f32 to vector<12x12xf32>
    %108 = arith.mulf %107, %106 : vector<12x12xf32>
    %109 = arith.addf %105, %108 : vector<12x12xf32>
    %110 = vector.extract_strided_slice %101 {offsets = [0, 2], sizes = [12, 12], strides = [1, 1]} : vector<12x16xf32> to vector<12x12xf32>
    %cst_39 = arith.constant -1.000000e+00 : f32
    %111 = vector.broadcast %cst_39 : f32 to vector<12x12xf32>
    %112 = arith.mulf %111, %110 : vector<12x12xf32>
    %113 = arith.addf %109, %112 : vector<12x12xf32>
    %114 = vector.extract_strided_slice %101 {offsets = [0, 3], sizes = [12, 12], strides = [1, 1]} : vector<12x16xf32> to vector<12x12xf32>
    %cst_40 = arith.constant 0.666666686 : f32
    %115 = vector.broadcast %cst_40 : f32 to vector<12x12xf32>
    %116 = arith.mulf %115, %114 : vector<12x12xf32>
    %117 = arith.addf %113, %116 : vector<12x12xf32>
    %118 = vector.extract_strided_slice %101 {offsets = [0, 4], sizes = [12, 12], strides = [1, 1]} : vector<12x16xf32> to vector<12x12xf32>
    %cst_41 = arith.constant -0.166666672 : f32
    %119 = vector.broadcast %cst_41 : f32 to vector<12x12xf32>
    %120 = arith.mulf %119, %118 : vector<12x12xf32>
    %121 = arith.addf %117, %120 : vector<12x12xf32>
    %c3_i32_42 = arith.constant 3 : i32
    %122 = arith.addi %0, %c3_i32_42 : i32
    %c0_43 = arith.constant 0 : index
    %c1_44 = arith.constant 1 : index
    %123 = arith.index_cast %122 : i32 to index
    %c0_45 = arith.constant 0 : index
    %124 = vector.load %arg2[%c0_43, %c1_44, %123, %c0_45] : memref<1x3x16x16xf32, #tpu.memory_space<vmem>>, vector<1x1x12x16xf32>
    %125 = vector.shape_cast %124 : vector<1x1x12x16xf32> to vector<12x16xf32>
    %126 = vector.extract_strided_slice %125 {offsets = [0, 0], sizes = [12, 12], strides = [1, 1]} : vector<12x16xf32> to vector<12x12xf32>
    %cst_46 = arith.constant 0.166666672 : f32
    %127 = vector.broadcast %cst_46 : f32 to vector<12x12xf32>
    %128 = arith.mulf %127, %126 : vector<12x12xf32>
    %129 = arith.addf %121, %128 : vector<12x12xf32>
    %130 = vector.extract_strided_slice %125 {offsets = [0, 1], sizes = [12, 12], strides = [1, 1]} : vector<12x16xf32> to vector<12x12xf32>
    %cst_47 = arith.constant -5.000000e-01 : f32
    %131 = vector.broadcast %cst_47 : f32 to vector<12x12xf32>
    %132 = arith.mulf %131, %130 : vector<12x12xf32>
    %133 = arith.addf %129, %132 : vector<12x12xf32>
    %134 = vector.extract_strided_slice %125 {offsets = [0, 2], sizes = [12, 12], strides = [1, 1]} : vector<12x16xf32> to vector<12x12xf32>
    %cst_48 = arith.constant 0.666666686 : f32
    %135 = vector.broadcast %cst_48 : f32 to vector<12x12xf32>
    %136 = arith.mulf %135, %134 : vector<12x12xf32>
    %137 = arith.addf %133, %136 : vector<12x12xf32>
    %138 = vector.extract_strided_slice %125 {offsets = [0, 3], sizes = [12, 12], strides = [1, 1]} : vector<12x16xf32> to vector<12x12xf32>
    %cst_49 = arith.constant -5.000000e-01 : f32
    %139 = vector.broadcast %cst_49 : f32 to vector<12x12xf32>
    %140 = arith.mulf %139, %138 : vector<12x12xf32>
    %141 = arith.addf %137, %140 : vector<12x12xf32>
    %142 = vector.extract_strided_slice %125 {offsets = [0, 4], sizes = [12, 12], strides = [1, 1]} : vector<12x16xf32> to vector<12x12xf32>
    %cst_50 = arith.constant 0.166666672 : f32
    %143 = vector.broadcast %cst_50 : f32 to vector<12x12xf32>
    %144 = arith.mulf %143, %142 : vector<12x12xf32>
    %145 = arith.addf %141, %144 : vector<12x12xf32>
    %c4_i32 = arith.constant 4 : i32
    %146 = arith.addi %0, %c4_i32 : i32
    %c0_51 = arith.constant 0 : index
    %c1_52 = arith.constant 1 : index
    %147 = arith.index_cast %146 : i32 to index
    %c0_53 = arith.constant 0 : index
    %148 = vector.load %arg2[%c0_51, %c1_52, %147, %c0_53] : memref<1x3x16x16xf32, #tpu.memory_space<vmem>>, vector<1x1x12x16xf32>
    %149 = vector.shape_cast %148 : vector<1x1x12x16xf32> to vector<12x16xf32>
    %150 = vector.extract_strided_slice %149 {offsets = [0, 0], sizes = [12, 12], strides = [1, 1]} : vector<12x16xf32> to vector<12x12xf32>
    %cst_54 = arith.constant -0.0833333358 : f32
    %151 = vector.broadcast %cst_54 : f32 to vector<12x12xf32>
    %152 = arith.mulf %151, %150 : vector<12x12xf32>
    %153 = arith.addf %145, %152 : vector<12x12xf32>
    %154 = vector.extract_strided_slice %149 {offsets = [0, 1], sizes = [12, 12], strides = [1, 1]} : vector<12x16xf32> to vector<12x12xf32>
    %cst_55 = arith.constant 0.166666672 : f32
    %155 = vector.broadcast %cst_55 : f32 to vector<12x12xf32>
    %156 = arith.mulf %155, %154 : vector<12x12xf32>
    %157 = arith.addf %153, %156 : vector<12x12xf32>
    %158 = vector.extract_strided_slice %149 {offsets = [0, 2], sizes = [12, 12], strides = [1, 1]} : vector<12x16xf32> to vector<12x12xf32>
    %cst_56 = arith.constant -0.166666672 : f32
    %159 = vector.broadcast %cst_56 : f32 to vector<12x12xf32>
    %160 = arith.mulf %159, %158 : vector<12x12xf32>
    %161 = arith.addf %157, %160 : vector<12x12xf32>
    %162 = vector.extract_strided_slice %149 {offsets = [0, 3], sizes = [12, 12], strides = [1, 1]} : vector<12x16xf32> to vector<12x12xf32>
    %cst_57 = arith.constant 0.166666672 : f32
    %163 = vector.broadcast %cst_57 : f32 to vector<12x12xf32>
    %164 = arith.mulf %163, %162 : vector<12x12xf32>
    %165 = arith.addf %161, %164 : vector<12x12xf32>
    %166 = vector.extract_strided_slice %149 {offsets = [0, 4], sizes = [12, 12], strides = [1, 1]} : vector<12x16xf32> to vector<12x12xf32>
    %cst_58 = arith.constant -0.0833333358 : f32
    %167 = vector.broadcast %cst_58 : f32 to vector<12x12xf32>
    %168 = arith.mulf %167, %166 : vector<12x12xf32>
    %169 = arith.addf %165, %168 : vector<12x12xf32>
    %c2_i32_59 = arith.constant 2 : i32
    %170 = arith.addi %0, %c2_i32_59 : i32
    %c0_60 = arith.constant 0 : index
    %c2 = arith.constant 2 : index
    %171 = arith.index_cast %170 : i32 to index
    %c0_61 = arith.constant 0 : index
    %172 = vector.load %arg2[%c0_60, %c2, %171, %c0_61] : memref<1x3x16x16xf32, #tpu.memory_space<vmem>>, vector<1x1x12x16xf32>
    %173 = vector.shape_cast %172 : vector<1x1x12x16xf32> to vector<12x16xf32>
    %174 = vector.extract_strided_slice %173 {offsets = [0, 1], sizes = [12, 12], strides = [1, 1]} : vector<12x16xf32> to vector<12x12xf32>
    %cst_62 = arith.constant 5.000000e-01 : f32
    %175 = vector.broadcast %cst_62 : f32 to vector<12x12xf32>
    %176 = arith.mulf %175, %174 : vector<12x12xf32>
    %177 = arith.addf %169, %176 : vector<12x12xf32>
    %178 = vector.extract_strided_slice %173 {offsets = [0, 2], sizes = [12, 12], strides = [1, 1]} : vector<12x16xf32> to vector<12x12xf32>
    %cst_63 = arith.constant -1.000000e+00 : f32
    %179 = vector.broadcast %cst_63 : f32 to vector<12x12xf32>
    %180 = arith.mulf %179, %178 : vector<12x12xf32>
    %181 = arith.addf %177, %180 : vector<12x12xf32>
    %182 = vector.extract_strided_slice %173 {offsets = [0, 3], sizes = [12, 12], strides = [1, 1]} : vector<12x16xf32> to vector<12x12xf32>
    %cst_64 = arith.constant 5.000000e-01 : f32
    %183 = vector.broadcast %cst_64 : f32 to vector<12x12xf32>
    %184 = arith.mulf %183, %182 : vector<12x12xf32>
    %185 = arith.addf %181, %184 : vector<12x12xf32>
    %186 = vector.shape_cast %185 : vector<12x12xf32> to vector<1x1x12x12xf32>
    %187 = vector.shape_cast %186 : vector<1x1x12x12xf32> to vector<1x1x12x12xf32>
    %188 = vector.broadcast %187 : vector<1x1x12x12xf32> to vector<1x30x12x12xf32>
    %c0_65 = arith.constant 0 : index
    %c0_66 = arith.constant 0 : index
    %c0_67 = arith.constant 0 : index
    %c0_68 = arith.constant 0 : index
    %189 = vector.load %arg3[%c0_65, %c0_66, %c0_67, %c0_68] : memref<1x30x12x12xf32, #tpu.memory_space<vmem>>, vector<1x30x12x12xf32>
    tpu.vector_store %arg3[%c0_65, %c0_66, %c0_67, %c0_68], %188 {strides = array<i32>} : memref<1x30x12x12xf32, #tpu.memory_space<vmem>>, vector<1x30x12x12xf32>,
    return
  }
  func.func @transform_0(%arg0: i32, %arg1: i32) -> (i32, i32, i32, i32) {
    %c0_i32 = arith.constant 0 : i32
    %c0_i32_0 = arith.constant 0 : i32
    %c0_i32_1 = arith.constant 0 : i32
    %c0_i32_2 = arith.constant 0 : i32
    return %arg0, %c0_i32, %c0_i32_0, %c0_i32_1 : i32, i32, i32, i32
  }
  func.func @transform_1(%arg0: i32, %arg1: i32) -> (i32, i32, i32, i32) {
    %c0_i32 = arith.constant 0 : i32
    %c0_i32_0 = arith.constant 0 : i32
    %c0_i32_1 = arith.constant 0 : i32
    return %arg0, %c0_i32, %arg1, %c0_i32_0 : i32, i32, i32, i32
  }
}

</mosaic_0001>

<llo_original>
// kernel: tpu_custom_call.1
$region0: #{tpu_custom_call.1}
  #allocation0 [shape = 'u32[]', space=smem, size = 0x4, offset = 0x4, fixed_abs, tag = 'smem constant byte address 0x4 - core index']
  #allocation1 [shape = 'u32[144,128]{1,0:T(1,128)}', space=vmem, size = 0x12000, scoped, tag = 'internal scratch']
  %s0 = inlined_call_operand.hbm [shape: f32[2,3,16,16], index: 0, kind: input, shape index: {}]
  %s1 = inlined_call_operand.vmem [shape: f32[2,30,12,12], index: 1, kind: output, shape index: {}]
  %s2 = sld [smem:[#allocation0]]
  $region41: #{tpu_custom_call.1} parent=0
    _
  %s4 = ssub.s32 1, %s2
  %s5 = scalar_select 0, %s4, %s2
  $region1: #{tpu_custom_call.1} parent=0
    #allocation2 [shape = 'u8[49152]{0}', space=vmem, size = 0xc000, scoped, tag = 'input window, operand 0']
    #allocation3 [shape = 's32[2]{0}', space=sflag, size = 0x8, scoped, tag = 'scoped memory for tpu_custom_call.1']
    %6 = vsyncpa [#allocation3], 0
    %s7 = scalar_lea.sflag [#allocation3], 1
    %8 = vsyncpa %s7, 0
    loop: start=0, step=1, limit=4
    $region2: #{tpu_custom_call.1} parent=1 // loop_pre_header
      _
    $region3: #{tpu_custom_call.1} parent=1 // loop_header
      %s10 = sphi 0, %s14
      %p11 = scmp.ge.s32.totalorder %s10, 4
      %s17 = sphi 0, %s29
      %s18 = sphi 0, %s25
      %s19 = sphi 0, %s17
      %s20 = sphi 0, %s18
      %s21 = sphi 0, %s19
      %s22 = sphi 0, %s20
      %s32 = sphi 0, %s34
      %s35 = sphi 0, %s32
      %s36 = sphi 0, %s35
      %s52 = sphi 0, %s36
      %s60 = sphi 0, %s62
      %s63 = sphi 0, %s60
      %s64 = sphi 0, %s63
      %s80 = sphi 0, %s64
    $region4: #{tpu_custom_call.1} parent=1 // loop_header_branch
      %13 = sbr.rel (%p11) target = $region8
    $region5: #{tpu_custom_call.1} parent=1 // loop_body
      %s15 = ssub.s32 %s10, 1
      %s16 = ssub.s32 %s10, 2
      %s23 = sadd.s32 1, %s18
      %p24 = scmp.ge.s32.totalorder %s23, 1
      %s25 = scalar_select %p24, 0, %s23
      %s26 = sadd.s32 1, %s17
      %s27 = scalar_select %p24, %s26, %s17
      %p28 = scmp.ge.s32.totalorder %s27, 2
      %s29 = scalar_select %p28, 0, %s27
      %s30 = ssub.s32 %s17, %s29
      %p31 = scmp.eq.s32.totalorder %s30, 0
      %s33 = sadd.s32 %s32, 1
      %s34 = scalar_select %p31, %s32, %s33
      %p37 = pneg %p31
      %p38 = scmp.eq.s32.totalorder %s10, 1
      %p39 = por %p37, %p38
      %p40 = scmp.ne.s32.totalorder %s32, %s35
      %p41 = scmp.eq.s32.totalorder %s10, 0
      %p42 = por %p40, %p41
      %p43 = scmp.ne.s32.totalorder %s32, %s35
      %p44 = scmp.eq.s32.totalorder %s15, 1
      %p45 = por %p43, %p44
      %p46 = scmp.ne.s32.totalorder %s35, %s36
      %p47 = scmp.eq.s32.totalorder %s15, 0
      %p48 = por %p46, %p47
      %p49 = scmp.ne.s32.totalorder %s35, %s36
      %p50 = scmp.eq.s32.totalorder %s16, 1
      %p51 = por %p49, %p50
      %p53 = scmp.ne.s32.totalorder %s36, %s52
      %p54 = scmp.eq.s32.totalorder %s16, 0
      %p55 = por %p53, %p54
      %s56 = ssub.s32 %s17, %s29
      %s57 = ssub.s32 %s18, %s25
      %s58 = sor.u32 %s56, %s57
      %p59 = scmp.eq.s32.totalorder %s58, 0
      %s61 = sadd.s32 %s60, 1
      %s62 = scalar_select %p59, %s60, %s61
      %p65 = pneg %p59
      %p66 = scmp.eq.s32.totalorder %s10, 1
      %p67 = por %p65, %p66
      %p68 = scmp.ne.s32.totalorder %s60, %s63
      %p69 = scmp.eq.s32.totalorder %s10, 0
      %p70 = por %p68, %p69
      %p71 = scmp.ne.s32.totalorder %s60, %s63
      %p72 = scmp.eq.s32.totalorder %s15, 1
      %p73 = por %p71, %p72
      %p74 = scmp.ne.s32.totalorder %s63, %s64
      %p75 = scmp.eq.s32.totalorder %s15, 0
      %p76 = por %p74, %p75
      %p77 = scmp.ne.s32.totalorder %s63, %s64
      %p78 = scmp.eq.s32.totalorder %s16, 1
      %p79 = por %p77, %p78
      %p81 = scmp.ne.s32.totalorder %s64, %s80
      %p82 = scmp.eq.s32.totalorder %s16, 0
      %p83 = por %p81, %p82
      %p84 = scmp.le.s32.totalorder 1, %s10
      %p85 = scmp.lt.s32.totalorder %s10, 3
      %p86 = pnand %p84, %p85
      %p87 = pneg %p86
      // Predicated region
      $region9: #{tpu_custom_call.1} parent=5 // pred_check
        _
      $region10: #{tpu_custom_call.1} parent=5 // pred_check_branch
        %89 = sbr.rel (%p86) target = $region12
      $region11: #{tpu_custom_call.1} parent=5 // pred_region
        %s90 = ssub.s32 %s10, 1
      $region12: #{tpu_custom_call.1} parent=5 // pred_fallthru
        _
      %p91 = scmp.lt.s32.totalorder %s10, 2
      // Predicated region
      $region13: #{tpu_custom_call.1} parent=5 // pred_check
        %p92 = pneg %p91
      $region14: #{tpu_custom_call.1} parent=5 // pred_check_branch
        %94 = sbr.rel (%p92) target = $region16
      $region15: #{tpu_custom_call.1} parent=5 // pred_region
        // Predicated region
        $region17: #{tpu_custom_call.1} parent=15 // pred_check
          %p95 = pneg %p42
        $region18: #{tpu_custom_call.1} parent=15 // pred_check_branch
          %97 = sbr.rel (%p95) target = $region20
        $region19: #{tpu_custom_call.1} parent=15 // pred_region
          %s98 = sand.u32 %s32, 1
          %s99 = scalar_lea.sflag [#allocation3], %s98
          %s100 = sand.u32 %s32, 1
          %s101 = smul.addr %s100, 48
          %s102 = scalar_lea.vmem [#allocation2], %s101
          %s104 = ssub.s32 768, 768
          %105 = vsyncadd %s99, %s104
          %s106 = smul.addr %s17, 6
          %s107 = smul.addr %s106, 128
          %s108 = scalar_lea.hbm %s0, %s107
          %s109 = sshll.u32 %s102, 4
          %s110 = int_to_ptr.vmem [resolvable:$true] %s109
          %115 = dma.hbm_to_vmem [thread:$0]  %s108, 768, %s110, %s99, 128, 128, 8
        $region20: #{tpu_custom_call.1} parent=15 // pred_fallthru
          _
      $region16: #{tpu_custom_call.1} parent=5 // pred_fallthru
        _
      %p116 = scmp.le.s32.totalorder 1, %s10
      %p117 = scmp.lt.s32.totalorder %s10, 3
      %p118 = pnand %p116, %p117
      %p119 = pneg %p118
      // Predicated region
      $region21: #{tpu_custom_call.1} parent=5 // pred_check
        _
      $region22: #{tpu_custom_call.1} parent=5 // pred_check_branch
        %121 = sbr.rel (%p118) target = $region24
      $region23: #{tpu_custom_call.1} parent=5 // pred_region
        %s122 = ssub.s32 %s10, 1
        %s123 = sand.u32 %s35, 1
        %s124 = scalar_lea.sflag [#allocation3], %s123
        %s125 = sand.u32 %s35, 1
        %s126 = smul.addr %s125, 48
        %s127 = scalar_lea.vmem [#allocation2], %s126
        // Predicated region
        $region25: #{tpu_custom_call.1} parent=23 // pred_check
          %p128 = pneg %p48
        $region26: #{tpu_custom_call.1} parent=23 // pred_check_branch
          %130 = sbr.rel (%p128) target = $region28
        $region27: #{tpu_custom_call.1} parent=23 // pred_region
          %131 = dma.done %s124, 768
        $region28: #{tpu_custom_call.1} parent=23 // pred_fallthru
          _
        %s132 = sand.u32 %s35, 1
        %s133 = scalar_lea.sflag [#allocation3], %s132
        %s134 = sand.u32 %s35, 1
        %s135 = smul.addr %s134, 48
        %s136 = scalar_lea.vmem [#allocation2], %s135
        %p137 = pneg %p48
        %p138 = pneg %p45
        %p139 = pneg %p76
        %p140 = pneg %p73
        %s141 = smul.u32 2, %s20
        %p142 = scmp.lt.s32.totalorder %s19, 1
        %s143 = scalar_select %p142, %s19, 1
        %p144 = scmp.lt.s32.totalorder %s141, 1
        %s145 = scalar_select %p144, %s141, 1
        %s146 = smul.addr %s143, 60
        %s147 = sadd.s32 %s145, %s146
        %s148 = smul.addr %s147, 8
        %s149 = scalar_lea.vmem %s1, %s148
        %s150 = smul.u32 2, %s20
        %p151 = scmp.lt.s32.totalorder %s19, 1
        %s152 = scalar_select %p151, %s19, 1
        %p153 = scmp.lt.s32.totalorder %s150, 1
        %s154 = scalar_select %p153, %s150, 1
        %s155 = smul.addr %s152, 60
        %s156 = sadd.s32 %s154, %s155
        %s157 = smul.addr %s156, 8
        %s158 = scalar_lea.vmem %s1, %s157
        %s159 = smul.u32 2, %s20
        %s160 = smul.u32 %s20, 12
        %s161 = sadd.s32 %s160, 1
        %s162 = scalar_lea.vmem %s127, %s161 [#allocation2]
        %v163 = vld [vmem:[%s162] sm:$0xff]
        %v164 = vld [vmem:[%s162 + $0x8] sm:$0xf]
        %v165 = vmul.f32 %v163, -0.25
        %v166 = vmul.f32 %v164, -0.25
        %v167 = vadd.f32 %v165, 0.0
        %v168 = vadd.f32 %v166, 0.0
        %v169 = vmul.f32 %v163, 0.5
        %v170 = vmul.f32 %v164, 0.5
        %173 = vrot.lane.b32.xlu0 %v169, 127
        %v174 = vpop.permute.xlu0 %173
        %175 = vrot.lane.b32.xlu0 %v170, 127
        %v176 = vpop.permute.xlu0 %175
        %v179 = vadd.f32 %v167, %v174
        %v180 = vadd.f32 %v168, %v176
        %183 = vrot.lane.b32.xlu0 %v165, 126
        %v184 = vpop.permute.xlu0 %183
        %185 = vrot.lane.b32.xlu0 %v166, 126
        %v186 = vpop.permute.xlu0 %185
        %v189 = vadd.f32 %v179, %v184
        %v190 = vadd.f32 %v180, %v186
        %s191 = sadd.s32 %s160, 2
        %s192 = scalar_lea.vmem %s127, %s191 [#allocation2]
        %v193 = vld [vmem:[%s192] sm:$0xff]
        %v194 = vld [vmem:[%s192 + $0x8] sm:$0xf]
        %v195 = vmul.f32 %v193, 0.5
        %v196 = vmul.f32 %v194, 0.5
        %v197 = vadd.f32 %v189, %v195
        %v198 = vadd.f32 %v190, %v196
        %v199 = vmul.f32 %v193, -1.0
        %v200 = vmul.f32 %v194, -1.0
        %203 = vrot.lane.b32.xlu0 %v199, 127
        %v204 = vpop.permute.xlu0 %203
        %205 = vrot.lane.b32.xlu0 %v200, 127
        %v206 = vpop.permute.xlu0 %205
        %v209 = vadd.f32 %v197, %v204
        %v210 = vadd.f32 %v198, %v206
        %213 = vrot.lane.b32.xlu0 %v195, 126
        %v214 = vpop.permute.xlu0 %213
        %215 = vrot.lane.b32.xlu0 %v196, 126
        %v216 = vpop.permute.xlu0 %215
        %v219 = vadd.f32 %v209, %v214
        %v220 = vadd.f32 %v210, %v216
        %s221 = sadd.s32 %s160, 3
        %s222 = scalar_lea.vmem %s127, %s221 [#allocation2]
        %v223 = vld [vmem:[%s222] sm:$0xff]
        %v224 = vld [vmem:[%s222 + $0x8] sm:$0xf]
        %v225 = vmul.f32 %v223, -0.25
        %v226 = vmul.f32 %v224, -0.25
        %v227 = vadd.f32 %v219, %v225
        %v228 = vadd.f32 %v220, %v226
        %v229 = vmul.f32 %v223, 0.5
        %v230 = vmul.f32 %v224, 0.5
        %233 = vrot.lane.b32.xlu0 %v229, 127
        %v234 = vpop.permute.xlu0 %233
        %235 = vrot.lane.b32.xlu0 %v230, 127
        %v236 = vpop.permute.xlu0 %235
        %v239 = vadd.f32 %v227, %v234
        %v240 = vadd.f32 %v228, %v236
        %243 = vrot.lane.b32.xlu0 %v225, 126
        %v244 = vpop.permute.xlu0 %243
        %245 = vrot.lane.b32.xlu0 %v226, 126
        %v246 = vpop.permute.xlu0 %245
        %v249 = vadd.f32 %v239, %v244
        %v250 = vadd.f32 %v240, %v246
        %s251 = sadd.s32 %s160, 16
        %s252 = scalar_lea.vmem %s127, %s251 [#allocation2]
        %v253 = vld [vmem:[%s252] sm:$0xff]
        %v254 = vld [vmem:[%s252 + $0x8] sm:$0xf]
        %v255 = vmul.f32 %v253, -0.083333336
        %v256 = vmul.f32 %v254, -0.083333336
        %259 = vrot.lane.b32.xlu0 %v255, 1
        %v260 = vpop.permute.xlu0 %259
        %261 = vrot.lane.b32.xlu0 %v256, 1
        %v262 = vpop.permute.xlu0 %261
        %v265 = vadd.f32 %v249, %v260
        %v266 = vadd.f32 %v250, %v262
        %v267 = vmul.f32 %v253, 0.16666667
        %v268 = vmul.f32 %v254, 0.16666667
        %v269 = vadd.f32 %v265, %v267
        %v270 = vadd.f32 %v266, %v268
        %v271 = vmul.f32 %v253, -0.16666667
        %v272 = vmul.f32 %v254, -0.16666667
        %275 = vrot.lane.b32.xlu0 %v271, 127
        %v276 = vpop.permute.xlu0 %275
        %277 = vrot.lane.b32.xlu0 %v272, 127
        %v278 = vpop.permute.xlu0 %277
        %v281 = vadd.f32 %v269, %v276
        %v282 = vadd.f32 %v270, %v278
        %285 = vrot.lane.b32.xlu0 %v267, 126
        %v286 = vpop.permute.xlu0 %285
        %287 = vrot.lane.b32.xlu0 %v268, 126
        %v288 = vpop.permute.xlu0 %287
        %v291 = vadd.f32 %v281, %v286
        %v292 = vadd.f32 %v282, %v288
        %293 = vrot.lane.b32.xlu0 %v255, 125
        %v294 = vpop.permute.xlu0 %293
        %295 = vrot.lane.b32.xlu0 %v256, 125
        %v296 = vpop.permute.xlu0 %295
        %v299 = vadd.f32 %v291, %v294
        %v300 = vadd.f32 %v292, %v296
        %s301 = sadd.s32 %s161, 16
        %s302 = scalar_lea.vmem %s127, %s301 [#allocation2]
        %v303 = vld [vmem:[%s302] sm:$0xff]
        %v304 = vld [vmem:[%s302 + $0x8] sm:$0xf]
        %v305 = vmul.f32 %v303, 0.16666667
        %v306 = vmul.f32 %v304, 0.16666667
        %309 = vrot.lane.b32.xlu0 %v305, 1
        %v310 = vpop.permute.xlu0 %309
        %311 = vrot.lane.b32.xlu0 %v306, 1
        %v312 = vpop.permute.xlu0 %311
        %v315 = vadd.f32 %v299, %v310
        %v316 = vadd.f32 %v300, %v312
        %v317 = vmul.f32 %v303, -0.5
        %v318 = vmul.f32 %v304, -0.5
        %v319 = vadd.f32 %v315, %v317
        %v320 = vadd.f32 %v316, %v318
        %v321 = vmul.f32 %v303, 0.6666667
        %v322 = vmul.f32 %v304, 0.6666667
        %325 = vrot.lane.b32.xlu0 %v321, 127
        %v326 = vpop.permute.xlu0 %325
        %327 = vrot.lane.b32.xlu0 %v322, 127
        %v328 = vpop.permute.xlu0 %327
        %v331 = vadd.f32 %v319, %v326
        %v332 = vadd.f32 %v320, %v328
        %335 = vrot.lane.b32.xlu0 %v317, 126
        %v336 = vpop.permute.xlu0 %335
        %337 = vrot.lane.b32.xlu0 %v318, 126
        %v338 = vpop.permute.xlu0 %337
        %v341 = vadd.f32 %v331, %v336
        %v342 = vadd.f32 %v332, %v338
        %343 = vrot.lane.b32.xlu0 %v305, 125
        %v344 = vpop.permute.xlu0 %343
        %345 = vrot.lane.b32.xlu0 %v306, 125
        %v346 = vpop.permute.xlu0 %345
        %v349 = vadd.f32 %v341, %v344
        %v350 = vadd.f32 %v342, %v346
        %s351 = sadd.s32 %s191, 16
        %s352 = scalar_lea.vmem %s127, %s351 [#allocation2]
        %v353 = vld [vmem:[%s352] sm:$0xff]
        %v354 = vld [vmem:[%s352 + $0x8] sm:$0xf]
        %v355 = vmul.f32 %v353, -0.16666667
        %v356 = vmul.f32 %v354, -0.16666667
        %359 = vrot.lane.b32.xlu0 %v355, 1
        %v360 = vpop.permute.xlu0 %359
        %361 = vrot.lane.b32.xlu0 %v356, 1
        %v362 = vpop.permute.xlu0 %361
        %v365 = vadd.f32 %v349, %v360
        %v366 = vadd.f32 %v350, %v362
        %v367 = vmul.f32 %v353, 0.6666667
        %v368 = vmul.f32 %v354, 0.6666667
        %v369 = vadd.f32 %v365, %v367
        %v370 = vadd.f32 %v366, %v368
        %v371 = vmul.f32 %v353, -1.0
        %v372 = vmul.f32 %v354, -1.0
        %375 = vrot.lane.b32.xlu0 %v371, 127
        %v376 = vpop.permute.xlu0 %375
        %377 = vrot.lane.b32.xlu0 %v372, 127
        %v378 = vpop.permute.xlu0 %377
        %v381 = vadd.f32 %v369, %v376
        %v382 = vadd.f32 %v370, %v378
        %385 = vrot.lane.b32.xlu0 %v367, 126
        %v386 = vpop.permute.xlu0 %385
        %387 = vrot.lane.b32.xlu0 %v368, 126
        %v388 = vpop.permute.xlu0 %387
        %v391 = vadd.f32 %v381, %v386
        %v392 = vadd.f32 %v382, %v388
        %393 = vrot.lane.b32.xlu0 %v355, 125
        %v394 = vpop.permute.xlu0 %393
        %395 = vrot.lane.b32.xlu0 %v356, 125
        %v396 = vpop.permute.xlu0 %395
        %v399 = vadd.f32 %v391, %v394
        %v400 = vadd.f32 %v392, %v396
        %s401 = sadd.s32 %s221, 16
        %s402 = scalar_lea.vmem %s127, %s401 [#allocation2]
        %v403 = vld [vmem:[%s402] sm:$0xff]
        %v404 = vld [vmem:[%s402 + $0x8] sm:$0xf]
        %v405 = vmul.f32 %v403, 0.16666667
        %v406 = vmul.f32 %v404, 0.16666667
        %409 = vrot.lane.b32.xlu0 %v405, 1
        %v410 = vpop.permute.xlu0 %409
        %411 = vrot.lane.b32.xlu0 %v406, 1
        %v412 = vpop.permute.xlu0 %411
        %v415 = vadd.f32 %v399, %v410
        %v416 = vadd.f32 %v400, %v412
        %v417 = vmul.f32 %v403, -0.5
        %v418 = vmul.f32 %v404, -0.5
        %v419 = vadd.f32 %v415, %v417
        %v420 = vadd.f32 %v416, %v418
        %v421 = vmul.f32 %v403, 0.6666667
        %v422 = vmul.f32 %v404, 0.6666667
        %425 = vrot.lane.b32.xlu0 %v421, 127
        %v426 = vpop.permute.xlu0 %425
        %427 = vrot.lane.b32.xlu0 %v422, 127
        %v428 = vpop.permute.xlu0 %427
        %v431 = vadd.f32 %v419, %v426
        %v432 = vadd.f32 %v420, %v428
        %435 = vrot.lane.b32.xlu0 %v417, 126
        %v436 = vpop.permute.xlu0 %435
        %437 = vrot.lane.b32.xlu0 %v418, 126
        %v438 = vpop.permute.xlu0 %437
        %v441 = vadd.f32 %v431, %v436
        %v442 = vadd.f32 %v432, %v438
        %443 = vrot.lane.b32.xlu0 %v405, 125
        %v444 = vpop.permute.xlu0 %443
        %445 = vrot.lane.b32.xlu0 %v406, 125
        %v446 = vpop.permute.xlu0 %445
        %v449 = vadd.f32 %v441, %v444
        %v450 = vadd.f32 %v442, %v446
        %s451 = sadd.s32 %s160, 4
        %s452 = sadd.s32 %s451, 16
        %s453 = scalar_lea.vmem %s127, %s452 [#allocation2]
        %v454 = vld [vmem:[%s453] sm:$0xff]
        %v455 = vld [vmem:[%s453 + $0x8] sm:$0xf]
        %v456 = vmul.f32 %v454, -0.083333336
        %v457 = vmul.f32 %v455, -0.083333336
        %460 = vrot.lane.b32.xlu0 %v456, 1
        %v461 = vpop.permute.xlu0 %460
        %462 = vrot.lane.b32.xlu0 %v457, 1
        %v463 = vpop.permute.xlu0 %462
        %v466 = vadd.f32 %v449, %v461
        %v467 = vadd.f32 %v450, %v463
        %v468 = vmul.f32 %v454, 0.16666667
        %v469 = vmul.f32 %v455, 0.16666667
        %v470 = vadd.f32 %v466, %v468
        %v471 = vadd.f32 %v467, %v469
        %v472 = vmul.f32 %v454, -0.16666667
        %v473 = vmul.f32 %v455, -0.16666667
        %476 = vrot.lane.b32.xlu0 %v472, 127
        %v477 = vpop.permute.xlu0 %476
        %478 = vrot.lane.b32.xlu0 %v473, 127
        %v479 = vpop.permute.xlu0 %478
        %v482 = vadd.f32 %v470, %v477
        %v483 = vadd.f32 %v471, %v479
        %486 = vrot.lane.b32.xlu0 %v468, 126
        %v487 = vpop.permute.xlu0 %486
        %488 = vrot.lane.b32.xlu0 %v469, 126
        %v489 = vpop.permute.xlu0 %488
        %v492 = vadd.f32 %v482, %v487
        %v493 = vadd.f32 %v483, %v489
        %494 = vrot.lane.b32.xlu0 %v456, 125
        %v495 = vpop.permute.xlu0 %494
        %496 = vrot.lane.b32.xlu0 %v457, 125
        %v497 = vpop.permute.xlu0 %496
        %v500 = vadd.f32 %v492, %v495
        %v501 = vadd.f32 %v493, %v497
        %s502 = sadd.s32 %s191, 32
        %s503 = scalar_lea.vmem %s127, %s502 [#allocation2]
        %v504 = vld [vmem:[%s503] sm:$0xff]
        %v505 = vld [vmem:[%s503 + $0x8] sm:$0xf]
        %v506 = vmul.f32 %v504, 0.5
        %v507 = vmul.f32 %v505, 0.5
        %v508 = vadd.f32 %v500, %v506
        %v509 = vadd.f32 %v501, %v507
        %v510 = vmul.f32 %v504, -1.0
        %v511 = vmul.f32 %v505, -1.0
        %514 = vrot.lane.b32.xlu0 %v510, 127
        %v515 = vpop.permute.xlu0 %514
        %516 = vrot.lane.b32.xlu0 %v511, 127
        %v517 = vpop.permute.xlu0 %516
        %v520 = vadd.f32 %v508, %v515
        %v521 = vadd.f32 %v509, %v517
        %524 = vrot.lane.b32.xlu0 %v506, 126
        %v525 = vpop.permute.xlu0 %524
        %526 = vrot.lane.b32.xlu0 %v507, 126
        %v527 = vpop.permute.xlu0 %526
        %v530 = vadd.f32 %v520, %v525
        %v531 = vadd.f32 %v521, %v527
        %534 = vrot.lane.b32.xlu0 %v530, 127
        %v535 = vpop.permute.xlu0 %534
        %536 = vrot.lane.b32.xlu0 %v531, 127
        %v537 = vpop.permute.xlu0 %536
        %vm540 = vcmask 97280
        %541 = vst.msk [vmem:[%s158] sm:$0xff] %vm540, %v535
        %vm542 = vcmask 93184
        %543 = vst.msk [vmem:[%s158 + $0x8] sm:$0xf] %vm542, %v537
        %544 = vst.msk [vmem:[%s158 + $0x10] sm:$0xff] %vm540, %v535
        %545 = vst.msk [vmem:[%s158 + $0x18] sm:$0xf] %vm542, %v537
        %546 = vst.msk [vmem:[%s158 + $0x20] sm:$0xff] %vm540, %v535
        %547 = vst.msk [vmem:[%s158 + $0x28] sm:$0xf] %vm542, %v537
        %548 = vst.msk [vmem:[%s158 + $0x30] sm:$0xff] %vm540, %v535
        %549 = vst.msk [vmem:[%s158 + $0x38] sm:$0xf] %vm542, %v537
        %550 = vst.msk [vmem:[%s158 + $0x40] sm:$0xff] %vm540, %v535
        %551 = vst.msk [vmem:[%s158 + $0x48] sm:$0xf] %vm542, %v537
        %552 = vst.msk [vmem:[%s158 + $0x50] sm:$0xff] %vm540, %v535
        %553 = vst.msk [vmem:[%s158 + $0x58] sm:$0xf] %vm542, %v537
        %554 = vst.msk [vmem:[%s158 + $0x60] sm:$0xff] %vm540, %v535
        %555 = vst.msk [vmem:[%s158 + $0x68] sm:$0xf] %vm542, %v537
        %556 = vst.msk [vmem:[%s158 + $0x70] sm:$0xff] %vm540, %v535
        %557 = vst.msk [vmem:[%s158 + $0x78] sm:$0xf] %vm542, %v537
        %558 = vst.msk [vmem:[%s158 + $0x80] sm:$0xff] %vm540, %v535
        %559 = vst.msk [vmem:[%s158 + $0x88] sm:$0xf] %vm542, %v537
        %560 = vst.msk [vmem:[%s158 + $0x90] sm:$0xff] %vm540, %v535
        %561 = vst.msk [vmem:[%s158 + $0x98] sm:$0xf] %vm542, %v537
        %562 = vst.msk [vmem:[%s158 + $0xa0] sm:$0xff] %vm540, %v535
        %563 = vst.msk [vmem:[%s158 + $0xa8] sm:$0xf] %vm542, %v537
        %564 = vst.msk [vmem:[%s158 + $0xb0] sm:$0xff] %vm540, %v535
        %565 = vst.msk [vmem:[%s158 + $0xb8] sm:$0xf] %vm542, %v537
        %566 = vst.msk [vmem:[%s158 + $0xc0] sm:$0xff] %vm540, %v535
        %567 = vst.msk [vmem:[%s158 + $0xc8] sm:$0xf] %vm542, %v537
        %568 = vst.msk [vmem:[%s158 + $0xd0] sm:$0xff] %vm540, %v535
        %569 = vst.msk [vmem:[%s158 + $0xd8] sm:$0xf] %vm542, %v537
        %570 = vst.msk [vmem:[%s158 + $0xe0] sm:$0xff] %vm540, %v535
        %571 = vst.msk [vmem:[%s158 + $0xe8] sm:$0xf] %vm542, %v537
        %572 = vst.msk [vmem:[%s158 + $0xf0] sm:$0xff] %vm540, %v535
        %573 = vst.msk [vmem:[%s158 + $0xf8] sm:$0xf] %vm542, %v537
        %574 = vst.msk [vmem:[%s158 + $0x100] sm:$0xff] %vm540, %v535
        %575 = vst.msk [vmem:[%s158 + $0x108] sm:$0xf] %vm542, %v537
        %576 = vst.msk [vmem:[%s158 + $0x110] sm:$0xff] %vm540, %v535
        %577 = vst.msk [vmem:[%s158 + $0x118] sm:$0xf] %vm542, %v537
        %578 = vst.msk [vmem:[%s158 + $0x120] sm:$0xff] %vm540, %v535
        %579 = vst.msk [vmem:[%s158 + $0x128] sm:$0xf] %vm542, %v537
        %580 = vst.msk [vmem:[%s158 + $0x130] sm:$0xff] %vm540, %v535
        %581 = vst.msk [vmem:[%s158 + $0x138] sm:$0xf] %vm542, %v537
        %582 = vst.msk [vmem:[%s158 + $0x140] sm:$0xff] %vm540, %v535
        %583 = vst.msk [vmem:[%s158 + $0x148] sm:$0xf] %vm542, %v537
        %584 = vst.msk [vmem:[%s158 + $0x150] sm:$0xff] %vm540, %v535
        %585 = vst.msk [vmem:[%s158 + $0x158] sm:$0xf] %vm542, %v537
        %586 = vst.msk [vmem:[%s158 + $0x160] sm:$0xff] %vm540, %v535
        %587 = vst.msk [vmem:[%s158 + $0x168] sm:$0xf] %vm542, %v537
        %588 = vst.msk [vmem:[%s158 + $0x170] sm:$0xff] %vm540, %v535
        %589 = vst.msk [vmem:[%s158 + $0x178] sm:$0xf] %vm542, %v537
        %590 = vst.msk [vmem:[%s158 + $0x180] sm:$0xff] %vm540, %v535
        %591 = vst.msk [vmem:[%s158 + $0x188] sm:$0xf] %vm542, %v537
        %592 = vst.msk [vmem:[%s158 + $0x190] sm:$0xff] %vm540, %v535
        %593 = vst.msk [vmem:[%s158 + $0x198] sm:$0xf] %vm542, %v537
        %594 = vst.msk [vmem:[%s158 + $0x1a0] sm:$0xff] %vm540, %v535
        %595 = vst.msk [vmem:[%s158 + $0x1a8] sm:$0xf] %vm542, %v537
        %596 = vst.msk [vmem:[%s158 + $0x1b0] sm:$0xff] %vm540, %v535
        %597 = vst.msk [vmem:[%s158 + $0x1b8] sm:$0xf] %vm542, %v537
        %598 = vst.msk [vmem:[%s158 + $0x1c0] sm:$0xff] %vm540, %v535
        %599 = vst.msk [vmem:[%s158 + $0x1c8] sm:$0xf] %vm542, %v537
        %600 = vst.msk [vmem:[%s158 + $0x1d0] sm:$0xff] %vm540, %v535
        %601 = vst.msk [vmem:[%s158 + $0x1d8] sm:$0xf] %vm542, %v537
        %s602 = smul.u32 2, %s20
        %p603 = scmp.lt.s32.totalorder %s19, 1
        %s604 = scalar_select %p603, %s19, 1
        %p605 = scmp.lt.s32.totalorder %s602, 1
        %s606 = scalar_select %p605, %s602, 1
        %s607 = smul.addr %s604, 60
        %s608 = sadd.s32 %s606, %s607
        %s609 = smul.addr %s608, 8
        %s610 = scalar_lea.vmem %s1, %s609
        // Predicated region
        $region29: #{tpu_custom_call.1} parent=23 // pred_check
          %p611 = pneg %p73
        $region30: #{tpu_custom_call.1} parent=23 // pred_check_branch
          %613 = sbr.rel (%p611) target = $region32
        $region31: #{tpu_custom_call.1} parent=23 // pred_region
          %s614 = smul.u32 2, %s20
        $region32: #{tpu_custom_call.1} parent=23 // pred_fallthru
          _
      $region24: #{tpu_custom_call.1} parent=5 // pred_fallthru
        _
      %p615 = scmp.le.s32.totalorder 2, %s10
      // Predicated region
      $region33: #{tpu_custom_call.1} parent=5 // pred_check
        %p616 = pneg %p615
      $region34: #{tpu_custom_call.1} parent=5 // pred_check_branch
        %618 = sbr.rel (%p616) target = $region36
      $region35: #{tpu_custom_call.1} parent=5 // pred_region
        %s619 = ssub.s32 %s10, 2
        // Predicated region
        $region37: #{tpu_custom_call.1} parent=35 // pred_check
          %p620 = pneg %p79
        $region38: #{tpu_custom_call.1} parent=35 // pred_check_branch
          %622 = sbr.rel (%p620) target = $region40
        $region39: #{tpu_custom_call.1} parent=35 // pred_region
          %s623 = smul.u32 2, %s22
          %p624 = scmp.lt.s32.totalorder %s21, 1
          %s625 = scalar_select %p624, %s21, 1
          %p626 = scmp.lt.s32.totalorder %s623, 1
          %s627 = scalar_select %p626, %s623, 1
          %s628 = smul.addr %s625, 60
          %s629 = sadd.s32 %s627, %s628
          %s630 = smul.addr %s629, 8
          %s631 = scalar_lea.vmem %s1, %s630
        $region40: #{tpu_custom_call.1} parent=35 // pred_fallthru
          _
      $region36: #{tpu_custom_call.1} parent=5 // pred_fallthru
        _
    $region6: #{tpu_custom_call.1} parent=1 // loop_footer
      %s14 = sadd.s32 1, %s10
    $region7: #{tpu_custom_call.1} parent=1 // loop_footer_branch
      %9 = sbr.rel target = $region3
    $region8: #{tpu_custom_call.1} parent=1 // loop_exit
      _
    %632 = vsyncpa [#allocation3], 1
    %s633 = scalar_lea.sflag [#allocation3], 1
    %634 = vsyncpa %s633, 1

</llo_original>
